<compile_context>
chip_gen: v5e
topology: v5e:2x2
jax: 0.10.0
libtpu: 0.0.40
codegen_flags: <defaults>
</compile_context>

<pallas_src>
import jax
import jax.numpy as jnp
from jax.experimental import pallas as pl
from jax.experimental.pallas import tpu as pltpu


# ----------------------------- Fused LSTM + fc kernel -----------------------------
def lstm_fc_kernel(x_ref, wih_ref, whh_ref, b_ref, wfc_ref, bfc_ref,
                   out_ref, last_scr):
    # x_ref   : (T*B, F)   time-major rows, flattened in the wrapper
    # wih_ref : (F, 4H)    whh_ref : (H, 4H)    b_ref : (1, 4H)
    # wfc_ref : (H, O)     bfc_ref : (1, O)
    # out_ref : (T, O)     last_scr: (T, H) VMEM scratch
    TB, F = x_ref.shape
    T = out_ref.shape[0]
    B = TB // T
    H = whh_ref.shape[0]

    # Hoisted input projection for ALL timesteps at once (one MXU push):
    #   (T*B, F) @ (F, 4H) + b  ->  (T*B, 4H)
    gx = (
        jnp.dot(x_ref[...], wih_ref[...], preferred_element_type=jnp.float32)
        + b_ref[...]
    )

    whh = whh_ref[...]                               # (H, 4H), loaded once
    h = jnp.zeros((B, H), jnp.float32)
    c = jnp.zeros((B, H), jnp.float32)

    # Statically unrolled time recurrence (T is small; carries live in vregs).
    for t in range(T):
        gates = gx[t * B:(t + 1) * B, :] + jnp.dot(
            h, whh, preferred_element_type=jnp.float32)        # (B, 4H)
        # PyTorch gate order [i, f, g, o]; static lane slices (no VMEM copies).
        i_g = jax.nn.sigmoid(gates[:, 0 * H:1 * H])
        f_g = jax.nn.sigmoid(gates[:, 1 * H:2 * H])
        g_g = jnp.tanh(gates[:, 2 * H:3 * H])
        o_g = jax.nn.sigmoid(gates[:, 3 * H:4 * H])
        c = f_g * c + i_g * g_g
        h = o_g * jnp.tanh(c)
        # out[:, -1, :] quirk: keep the LAST-BATCH row of h for this time step.
        last_scr[t:t + 1, :] = h[B - 1:B, :]

    # Fused fc head: one (T, H) @ (H, O) matmul; single small HBM write.
    out_ref[...] = (
        jnp.dot(last_scr[...], wfc_ref[...], preferred_element_type=jnp.float32)
        + bfc_ref[...]
    )


def lstm_model_forward_pallas(x, params):
    """x: (T, B, F) time-major -> (T, O), matching LSTMModel.forward."""
    T, B, F = x.shape
    H = params["w_hh_t"].shape[0]
    O = params["w_fc_t"].shape[1]

    x_flat = x.reshape(T * B, F)   # contiguous row-major flatten (free in XLA)

    vmem = lambda: pl.BlockSpec(memory_space=pltpu.MemorySpace.VMEM)
    return pl.pallas_call(
        lstm_fc_kernel,
        out_shape=jax.ShapeDtypeStruct((T, O), jnp.float32),
        in_specs=[vmem() for _ in range(6)],
        out_specs=vmem(),
        scratch_shapes=[pltpu.VMEM((T, H), jnp.float32)],   # last-batch h per step
    )(x_flat, params["w_ih_t"], params["w_hh_t"], params["b_lstm"],
      params["w_fc_t"], params["b_fc"])


lstm_model_forward = jax.jit(lstm_model_forward_pallas)


# ----------------------------- Pure-JAX reference -----------------------------
def lstm_model_reference(x, params):
    T, B, F = x.shape
    H = params["w_hh_t"].shape[0]
    w_ih_t, w_hh_t, b = params["w_ih_t"], params["w_hh_t"], params["b_lstm"]

    def step(carry, x_t):
        h, c = carry
        gates = x_t @ w_ih_t + h @ w_hh_t + b
        i = jax.nn.sigmoid(gates[:, 0 * H:1 * H])
        f = jax.nn.sigmoid(gates[:, 1 * H:2 * H])
        g = jnp.tanh(gates[:, 2 * H:3 * H])
        o = jax.nn.sigmoid(gates[:, 3 * H:4 * H])
        c = f * c + i * g
        h = o * jnp.tanh(c)
        return (h, c), h

    init = (jnp.zeros((B, H), jnp.float32), jnp.zeros((B, H), jnp.float32))
    _, out = jax.lax.scan(step, init, x)          # (T, B, H)
    last = out[:, -1, :]                          # (T, H): last BATCH element
    return last @ params["w_fc_t"] + params["b_fc"]


# ----------------------------- Parameter init -----------------------------
def init_params(key, input_size, hidden_size, output_size):
    ks = jax.random.split(key, 6)
    k = 1.0 / jnp.sqrt(hidden_size)
    # PyTorch stores W_ih: (4H, F), W_hh: (4H, H); pre-transpose for the kernel.
    w_ih = jax.random.uniform(ks[0], (4 * hidden_size, input_size), jnp.float32, -k, k)
    w_hh = jax.random.uniform(ks[1], (4 * hidden_size, hidden_size), jnp.float32, -k, k)
    b_ih = jax.random.uniform(ks[2], (4 * hidden_size,), jnp.float32, -k, k)
    b_hh = jax.random.uniform(ks[3], (4 * hidden_size,), jnp.float32, -k, k)
    kf = 1.0 / jnp.sqrt(hidden_size)
    w_fc = jax.random.uniform(ks[4], (output_size, hidden_size), jnp.float32, -kf, kf)
    b_fc = jax.random.uniform(ks[5], (output_size,), jnp.float32, -kf, kf)
    return {
        "w_ih_t": w_ih.T,                              # (F, 4H)
        "w_hh_t": w_hh.T,                              # (H, 4H)
        "b_lstm": (b_ih + b_hh).reshape(1, -1),        # (1, 4H)
        "w_fc_t": w_fc.T,                              # (H, O)
        "b_fc": b_fc.reshape(1, -1),                   # (1, O)
    }


if __name__ == "__main__":
    # Small synthetic sizes: KINEMATICS_FEATURES_SIZE -> 16, hidden -> 32, GESTURES_SIZE -> 8.
    T, B, F, H, O = 8, 2, 16, 32, 8

    key = jax.random.PRNGKey(0)
    k_x, k_p = jax.random.split(key)
    x = jax.random.normal(k_x, (T, B, F), jnp.float32)   # layout: (seq, batch, feature)
    params = init_params(k_p, F, H, O)

    out = lstm_model_forward(x, params)
    out = jax.block_until_ready(out)

    ref = lstm_model_reference(x, params)
    assert out.shape == (T, O), out.shape
    assert jnp.allclose(out, ref, rtol=1e-5, atol=1e-5), float(jnp.max(jnp.abs(out - ref)))

    print("KERNEL_OK")
</pallas_src>

<mosaic_0001>
module attributes {stable_mosaic.version = 11 : i64} {
  func.func @lstm_fc_kernel(%arg0: memref<16x16xf32, #tpu.memory_space<vmem>>, %arg1: memref<16x128xf32, #tpu.memory_space<vmem>>, %arg2: memref<32x128xf32, #tpu.memory_space<vmem>>, %arg3: memref<1x128xf32, #tpu.memory_space<vmem>>, %arg4: memref<32x8xf32, #tpu.memory_space<vmem>>, %arg5: memref<1x8xf32, #tpu.memory_space<vmem>>, %arg6: memref<8x8xf32, #tpu.memory_space<vmem>>, %arg7: memref<8x32xf32, #tpu.memory_space<vmem>>) attributes {dimension_semantics = [], scalar_prefetch = 0 : i64, scratch_operands = 1 : i64, tpu.core_type = #tpu.core_type<tc>} {
    %c0 = arith.constant 0 : index
    %c0_0 = arith.constant 0 : index
    %0 = vector.load %arg0[%c0, %c0_0] : memref<16x16xf32, #tpu.memory_space<vmem>>, vector<16x16xf32>
    %c0_1 = arith.constant 0 : index
    %c0_2 = arith.constant 0 : index
    %1 = vector.load %arg1[%c0_1, %c0_2] : memref<16x128xf32, #tpu.memory_space<vmem>>, vector<16x128xf32>
    %cst = arith.constant dense<0.000000e+00> : vector<16x128xf32>
    %2 = tpu.matmul %0, %1, %cst {dimension_numbers = #tpu.dot_dimension_numbers<[1], [0], [0], [1], [0, 0, 1, 1], [], []>} : vector<16x16xf32>, vector<16x128xf32>, vector<16x128xf32> -> vector<16x128xf32>
    %c0_3 = arith.constant 0 : index
    %c0_4 = arith.constant 0 : index
    %3 = vector.load %arg3[%c0_3, %c0_4] : memref<1x128xf32, #tpu.memory_space<vmem>>, vector<1x128xf32>
    %4 = vector.broadcast %3 : vector<1x128xf32> to vector<16x128xf32>
    %5 = arith.addf %2, %4 : vector<16x128xf32>
    %c0_5 = arith.constant 0 : index
    %c0_6 = arith.constant 0 : index
    %6 = vector.load %arg2[%c0_5, %c0_6] : memref<32x128xf32, #tpu.memory_space<vmem>>, vector<32x128xf32>
    %cst_7 = arith.constant 0.000000e+00 : f32
    %7 = vector.broadcast %cst_7 : f32 to vector<2x32xf32>
    %cst_8 = arith.constant 0.000000e+00 : f32
    %8 = vector.broadcast %cst_8 : f32 to vector<2x32xf32>
    %9 = vector.extract_strided_slice %5 {offsets = [0, 0], sizes = [2, 128], strides = [1, 1]} : vector<16x128xf32> to vector<2x128xf32>
    %cst_9 = arith.constant dense<0.000000e+00> : vector<2x128xf32>
    %10 = tpu.matmul %7, %6, %cst_9 {dimension_numbers = #tpu.dot_dimension_numbers<[1], [0], [0], [1], [0, 0, 1, 1], [], []>} : vector<2x32xf32>, vector<32x128xf32>, vector<2x128xf32> -> vector<2x128xf32>
    %11 = arith.addf %9, %10 : vector<2x128xf32>
    %12 = vector.extract_strided_slice %11 {offsets = [0, 0], sizes = [2, 32], strides = [1, 1]} : vector<2x128xf32> to vector<2x32xf32>
    %13 = arith.negf %12 : vector<2x32xf32>
    %14 = math.exp %13 : vector<2x32xf32>
    %cst_10 = arith.constant 1.000000e+00 : f32
    %15 = vector.broadcast %cst_10 : f32 to vector<2x32xf32>
    %16 = arith.addf %15, %14 : vector<2x32xf32>
    %17 = arith.divf %15, %16 : vector<2x32xf32>
    %18 = vector.extract_strided_slice %11 {offsets = [0, 32], sizes = [2, 32], strides = [1, 1]} : vector<2x128xf32> to vector<2x32xf32>
    %19 = arith.negf %18 : vector<2x32xf32>
    %20 = math.exp %19 : vector<2x32xf32>
    %cst_11 = arith.constant 1.000000e+00 : f32
    %21 = vector.broadcast %cst_11 : f32 to vector<2x32xf32>
    %22 = arith.addf %21, %20 : vector<2x32xf32>
    %23 = arith.divf %21, %22 : vector<2x32xf32>
    %24 = vector.extract_strided_slice %11 {offsets = [0, 64], sizes = [2, 32], strides = [1, 1]} : vector<2x128xf32> to vector<2x32xf32>
    %25 = math.tanh %24 : vector<2x32xf32>
    %26 = vector.extract_strided_slice %11 {offsets = [0, 96], sizes = [2, 32], strides = [1, 1]} : vector<2x128xf32> to vector<2x32xf32>
    %27 = arith.negf %26 : vector<2x32xf32>
    %28 = math.exp %27 : vector<2x32xf32>
    %cst_12 = arith.constant 1.000000e+00 : f32
    %29 = vector.broadcast %cst_12 : f32 to vector<2x32xf32>
    %30 = arith.addf %29, %28 : vector<2x32xf32>
    %31 = arith.divf %29, %30 : vector<2x32xf32>
    %32 = arith.mulf %23, %8 : vector<2x32xf32>
    %33 = arith.mulf %17, %25 : vector<2x32xf32>
    %34 = arith.addf %32, %33 : vector<2x32xf32>
    %35 = math.tanh %34 : vector<2x32xf32>
    %36 = arith.mulf %31, %35 : vector<2x32xf32>
    %37 = vector.extract_strided_slice %36 {offsets = [1, 0], sizes = [1, 32], strides = [1, 1]} : vector<2x32xf32> to vector<1x32xf32>
    %c0_13 = arith.constant 0 : index
    %c0_14 = arith.constant 0 : index
    %38 = vector.load %arg7[%c0_13, %c0_14] : memref<8x32xf32, #tpu.memory_space<vmem>>, vector<1x32xf32>
    tpu.vector_store %arg7[%c0_13, %c0_14], %37 {strides = array<i32>} : memref<8x32xf32, #tpu.memory_space<vmem>>, vector<1x32xf32>,
    %39 = vector.extract_strided_slice %5 {offsets = [2, 0], sizes = [2, 128], strides = [1, 1]} : vector<16x128xf32> to vector<2x128xf32>
    %cst_15 = arith.constant dense<0.000000e+00> : vector<2x128xf32>
    %40 = tpu.matmul %36, %6, %cst_15 {dimension_numbers = #tpu.dot_dimension_numbers<[1], [0], [0], [1], [0, 0, 1, 1], [], []>} : vector<2x32xf32>, vector<32x128xf32>, vector<2x128xf32> -> vector<2x128xf32>
    %41 = arith.addf %39, %40 : vector<2x128xf32>
    %42 = vector.extract_strided_slice %41 {offsets = [0, 0], sizes = [2, 32], strides = [1, 1]} : vector<2x128xf32> to vector<2x32xf32>
    %43 = arith.negf %42 : vector<2x32xf32>
    %44 = math.exp %43 : vector<2x32xf32>
    %cst_16 = arith.constant 1.000000e+00 : f32
    %45 = vector.broadcast %cst_16 : f32 to vector<2x32xf32>
    %46 = arith.addf %45, %44 : vector<2x32xf32>
    %47 = arith.divf %45, %46 : vector<2x32xf32>
    %48 = vector.extract_strided_slice %41 {offsets = [0, 32], sizes = [2, 32], strides = [1, 1]} : vector<2x128xf32> to vector<2x32xf32>
    %49 = arith.negf %48 : vector<2x32xf32>
    %50 = math.exp %49 : vector<2x32xf32>
    %cst_17 = arith.constant 1.000000e+00 : f32
    %51 = vector.broadcast %cst_17 : f32 to vector<2x32xf32>
    %52 = arith.addf %51, %50 : vector<2x32xf32>
    %53 = arith.divf %51, %52 : vector<2x32xf32>
    %54 = vector.extract_strided_slice %41 {offsets = [0, 64], sizes = [2, 32], strides = [1, 1]} : vector<2x128xf32> to vector<2x32xf32>
    %55 = math.tanh %54 : vector<2x32xf32>
    %56 = vector.extract_strided_slice %41 {offsets = [0, 96], sizes = [2, 32], strides = [1, 1]} : vector<2x128xf32> to vector<2x32xf32>
    %57 = arith.negf %56 : vector<2x32xf32>
    %58 = math.exp %57 : vector<2x32xf32>
    %cst_18 = arith.constant 1.000000e+00 : f32
    %59 = vector.broadcast %cst_18 : f32 to vector<2x32xf32>
    %60 = arith.addf %59, %58 : vector<2x32xf32>
    %61 = arith.divf %59, %60 : vector<2x32xf32>
    %62 = arith.mulf %53, %34 : vector<2x32xf32>
    %63 = arith.mulf %47, %55 : vector<2x32xf32>
    %64 = arith.addf %62, %63 : vector<2x32xf32>
    %65 = math.tanh %64 : vector<2x32xf32>
    %66 = arith.mulf %61, %65 : vector<2x32xf32>
    %67 = vector.extract_strided_slice %66 {offsets = [1, 0], sizes = [1, 32], strides = [1, 1]} : vector<2x32xf32> to vector<1x32xf32>
    %c1 = arith.constant 1 : index
    %c0_19 = arith.constant 0 : index
    %68 = vector.load %arg7[%c1, %c0_19] : memref<8x32xf32, #tpu.memory_space<vmem>>, vector<1x32xf32>
    tpu.vector_store %arg7[%c1, %c0_19], %67 {strides = array<i32>} : memref<8x32xf32, #tpu.memory_space<vmem>>, vector<1x32xf32>,
    %69 = vector.extract_strided_slice %5 {offsets = [4, 0], sizes = [2, 128], strides = [1, 1]} : vector<16x128xf32> to vector<2x128xf32>
    %cst_20 = arith.constant dense<0.000000e+00> : vector<2x128xf32>
    %70 = tpu.matmul %66, %6, %cst_20 {dimension_numbers = #tpu.dot_dimension_numbers<[1], [0], [0], [1], [0, 0, 1, 1], [], []>} : vector<2x32xf32>, vector<32x128xf32>, vector<2x128xf32> -> vector<2x128xf32>
    %71 = arith.addf %69, %70 : vector<2x128xf32>
    %72 = vector.extract_strided_slice %71 {offsets = [0, 0], sizes = [2, 32], strides = [1, 1]} : vector<2x128xf32> to vector<2x32xf32>
    %73 = arith.negf %72 : vector<2x32xf32>
    %74 = math.exp %73 : vector<2x32xf32>
    %cst_21 = arith.constant 1.000000e+00 : f32
    %75 = vector.broadcast %cst_21 : f32 to vector<2x32xf32>
    %76 = arith.addf %75, %74 : vector<2x32xf32>
    %77 = arith.divf %75, %76 : vector<2x32xf32>
    %78 = vector.extract_strided_slice %71 {offsets = [0, 32], sizes = [2, 32], strides = [1, 1]} : vector<2x128xf32> to vector<2x32xf32>
    %79 = arith.negf %78 : vector<2x32xf32>
    %80 = math.exp %79 : vector<2x32xf32>
    %cst_22 = arith.constant 1.000000e+00 : f32
    %81 = vector.broadcast %cst_22 : f32 to vector<2x32xf32>
    %82 = arith.addf %81, %80 : vector<2x32xf32>
    %83 = arith.divf %81, %82 : vector<2x32xf32>
    %84 = vector.extract_strided_slice %71 {offsets = [0, 64], sizes = [2, 32], strides = [1, 1]} : vector<2x128xf32> to vector<2x32xf32>
    %85 = math.tanh %84 : vector<2x32xf32>
    %86 = vector.extract_strided_slice %71 {offsets = [0, 96], sizes = [2, 32], strides = [1, 1]} : vector<2x128xf32> to vector<2x32xf32>
    %87 = arith.negf %86 : vector<2x32xf32>
    %88 = math.exp %87 : vector<2x32xf32>
    %cst_23 = arith.constant 1.000000e+00 : f32
    %89 = vector.broadcast %cst_23 : f32 to vector<2x32xf32>
    %90 = arith.addf %89, %88 : vector<2x32xf32>
    %91 = arith.divf %89, %90 : vector<2x32xf32>
    %92 = arith.mulf %83, %64 : vector<2x32xf32>
    %93 = arith.mulf %77, %85 : vector<2x32xf32>
    %94 = arith.addf %92, %93 : vector<2x32xf32>
    %95 = math.tanh %94 : vector<2x32xf32>
    %96 = arith.mulf %91, %95 : vector<2x32xf32>
    %97 = vector.extract_strided_slice %96 {offsets = [1, 0], sizes = [1, 32], strides = [1, 1]} : vector<2x32xf32> to vector<1x32xf32>
    %c2 = arith.constant 2 : index
    %c0_24 = arith.constant 0 : index
    %98 = vector.load %arg7[%c2, %c0_24] : memref<8x32xf32, #tpu.memory_space<vmem>>, vector<1x32xf32>
    tpu.vector_store %arg7[%c2, %c0_24], %97 {strides = array<i32>} : memref<8x32xf32, #tpu.memory_space<vmem>>, vector<1x32xf32>,
    %99 = vector.extract_strided_slice %5 {offsets = [6, 0], sizes = [2, 128], strides = [1, 1]} : vector<16x128xf32> to vector<2x128xf32>
    %cst_25 = arith.constant dense<0.000000e+00> : vector<2x128xf32>
    %100 = tpu.matmul %96, %6, %cst_25 {dimension_numbers = #tpu.dot_dimension_numbers<[1], [0], [0], [1], [0, 0, 1, 1], [], []>} : vector<2x32xf32>, vector<32x128xf32>, vector<2x128xf32> -> vector<2x128xf32>
    %101 = arith.addf %99, %100 : vector<2x128xf32>
    %102 = vector.extract_strided_slice %101 {offsets = [0, 0], sizes = [2, 32], strides = [1, 1]} : vector<2x128xf32> to vector<2x32xf32>
    %103 = arith.negf %102 : vector<2x32xf32>
    %104 = math.exp %103 : vector<2x32xf32>
    %cst_26 = arith.constant 1.000000e+00 : f32
    %105 = vector.broadcast %cst_26 : f32 to vector<2x32xf32>
    %106 = arith.addf %105, %104 : vector<2x32xf32>
    %107 = arith.divf %105, %106 : vector<2x32xf32>
    %108 = vector.extract_strided_slice %101 {offsets = [0, 32], sizes = [2, 32], strides = [1, 1]} : vector<2x128xf32> to vector<2x32xf32>
    %109 = arith.negf %108 : vector<2x32xf32>
    %110 = math.exp %109 : vector<2x32xf32>
    %cst_27 = arith.constant 1.000000e+00 : f32
    %111 = vector.broadcast %cst_27 : f32 to vector<2x32xf32>
    %112 = arith.addf %111, %110 : vector<2x32xf32>
    %113 = arith.divf %111, %112 : vector<2x32xf32>
    %114 = vector.extract_strided_slice %101 {offsets = [0, 64], sizes = [2, 32], strides = [1, 1]} : vector<2x128xf32> to vector<2x32xf32>
    %115 = math.tanh %114 : vector<2x32xf32>
    %116 = vector.extract_strided_slice %101 {offsets = [0, 96], sizes = [2, 32], strides = [1, 1]} : vector<2x128xf32> to vector<2x32xf32>
    %117 = arith.negf %116 : vector<2x32xf32>
    %118 = math.exp %117 : vector<2x32xf32>
    %cst_28 = arith.constant 1.000000e+00 : f32
    %119 = vector.broadcast %cst_28 : f32 to vector<2x32xf32>
    %120 = arith.addf %119, %118 : vector<2x32xf32>
    %121 = arith.divf %119, %120 : vector<2x32xf32>
    %122 = arith.mulf %113, %94 : vector<2x32xf32>
    %123 = arith.mulf %107, %115 : vector<2x32xf32>
    %124 = arith.addf %122, %123 : vector<2x32xf32>
    %125 = math.tanh %124 : vector<2x32xf32>
    %126 = arith.mulf %121, %125 : vector<2x32xf32>
    %127 = vector.extract_strided_slice %126 {offsets = [1, 0], sizes = [1, 32], strides = [1, 1]} : vector<2x32xf32> to vector<1x32xf32>
    %c3 = arith.constant 3 : index
    %c0_29 = arith.constant 0 : index
    %128 = vector.load %arg7[%c3, %c0_29] : memref<8x32xf32, #tpu.memory_space<vmem>>, vector<1x32xf32>
    tpu.vector_store %arg7[%c3, %c0_29], %127 {strides = array<i32>} : memref<8x32xf32, #tpu.memory_space<vmem>>, vector<1x32xf32>,
    %129 = vector.extract_strided_slice %5 {offsets = [8, 0], sizes = [2, 128], strides = [1, 1]} : vector<16x128xf32> to vector<2x128xf32>
    %cst_30 = arith.constant dense<0.000000e+00> : vector<2x128xf32>
    %130 = tpu.matmul %126, %6, %cst_30 {dimension_numbers = #tpu.dot_dimension_numbers<[1], [0], [0], [1], [0, 0, 1, 1], [], []>} : vector<2x32xf32>, vector<32x128xf32>, vector<2x128xf32> -> vector<2x128xf32>
    %131 = arith.addf %129, %130 : vector<2x128xf32>
    %132 = vector.extract_strided_slice %131 {offsets = [0, 0], sizes = [2, 32], strides = [1, 1]} : vector<2x128xf32> to vector<2x32xf32>
    %133 = arith.negf %132 : vector<2x32xf32>
    %134 = math.exp %133 : vector<2x32xf32>
    %cst_31 = arith.constant 1.000000e+00 : f32
    %135 = vector.broadcast %cst_31 : f32 to vector<2x32xf32>
    %136 = arith.addf %135, %134 : vector<2x32xf32>
    %137 = arith.divf %135, %136 : vector<2x32xf32>
    %138 = vector.extract_strided_slice %131 {offsets = [0, 32], sizes = [2, 32], strides = [1, 1]} : vector<2x128xf32> to vector<2x32xf32>
    %139 = arith.negf %138 : vector<2x32xf32>
    %140 = math.exp %139 : vector<2x32xf32>
    %cst_32 = arith.constant 1.000000e+00 : f32
    %141 = vector.broadcast %cst_32 : f32 to vector<2x32xf32>
    %142 = arith.addf %141, %140 : vector<2x32xf32>
    %143 = arith.divf %141, %142 : vector<2x32xf32>
    %144 = vector.extract_strided_slice %131 {offsets = [0, 64], sizes = [2, 32], strides = [1, 1]} : vector<2x128xf32> to vector<2x32xf32>
    %145 = math.tanh %144 : vector<2x32xf32>
    %146 = vector.extract_strided_slice %131 {offsets = [0, 96], sizes = [2, 32], strides = [1, 1]} : vector<2x128xf32> to vector<2x32xf32>
    %147 = arith.negf %146 : vector<2x32xf32>
    %148 = math.exp %147 : vector<2x32xf32>
    %cst_33 = arith.constant 1.000000e+00 : f32
    %149 = vector.broadcast %cst_33 : f32 to vector<2x32xf32>
    %150 = arith.addf %149, %148 : vector<2x32xf32>
    %151 = arith.divf %149, %150 : vector<2x32xf32>
    %152 = arith.mulf %143, %124 : vector<2x32xf32>
    %153 = arith.mulf %137, %145 : vector<2x32xf32>
    %154 = arith.addf %152, %153 : vector<2x32xf32>
    %155 = math.tanh %154 : vector<2x32xf32>
    %156 = arith.mulf %151, %155 : vector<2x32xf32>
    %157 = vector.extract_strided_slice %156 {offsets = [1, 0], sizes = [1, 32], strides = [1, 1]} : vector<2x32xf32> to vector<1x32xf32>
    %c4 = arith.constant 4 : index
    %c0_34 = arith.constant 0 : index
    %158 = vector.load %arg7[%c4, %c0_34] : memref<8x32xf32, #tpu.memory_space<vmem>>, vector<1x32xf32>
    tpu.vector_store %arg7[%c4, %c0_34], %157 {strides = array<i32>} : memref<8x32xf32, #tpu.memory_space<vmem>>, vector<1x32xf32>,
    %159 = vector.extract_strided_slice %5 {offsets = [10, 0], sizes = [2, 128], strides = [1, 1]} : vector<16x128xf32> to vector<2x128xf32>
    %cst_35 = arith.constant dense<0.000000e+00> : vector<2x128xf32>
    %160 = tpu.matmul %156, %6, %cst_35 {dimension_numbers = #tpu.dot_dimension_numbers<[1], [0], [0], [1], [0, 0, 1, 1], [], []>} : vector<2x32xf32>, vector<32x128xf32>, vector<2x128xf32> -> vector<2x128xf32>
    %161 = arith.addf %159, %160 : vector<2x128xf32>
    %162 = vector.extract_strided_slice %161 {offsets = [0, 0], sizes = [2, 32], strides = [1, 1]} : vector<2x128xf32> to vector<2x32xf32>
    %163 = arith.negf %162 : vector<2x32xf32>
    %164 = math.exp %163 : vector<2x32xf32>
    %cst_36 = arith.constant 1.000000e+00 : f32
    %165 = vector.broadcast %cst_36 : f32 to vector<2x32xf32>
    %166 = arith.addf %165, %164 : vector<2x32xf32>
    %167 = arith.divf %165, %166 : vector<2x32xf32>
    %168 = vector.extract_strided_slice %161 {offsets = [0, 32], sizes = [2, 32], strides = [1, 1]} : vector<2x128xf32> to vector<2x32xf32>
    %169 = arith.negf %168 : vector<2x32xf32>
    %170 = math.exp %169 : vector<2x32xf32>
    %cst_37 = arith.constant 1.000000e+00 : f32
    %171 = vector.broadcast %cst_37 : f32 to vector<2x32xf32>
    %172 = arith.addf %171, %170 : vector<2x32xf32>
    %173 = arith.divf %171, %172 : vector<2x32xf32>
    %174 = vector.extract_strided_slice %161 {offsets = [0, 64], sizes = [2, 32], strides = [1, 1]} : vector<2x128xf32> to vector<2x32xf32>
    %175 = math.tanh %174 : vector<2x32xf32>
    %176 = vector.extract_strided_slice %161 {offsets = [0, 96], sizes = [2, 32], strides = [1, 1]} : vector<2x128xf32> to vector<2x32xf32>
    %177 = arith.negf %176 : vector<2x32xf32>
    %178 = math.exp %177 : vector<2x32xf32>
    %cst_38 = arith.constant 1.000000e+00 : f32
    %179 = vector.broadcast %cst_38 : f32 to vector<2x32xf32>
    %180 = arith.addf %179, %178 : vector<2x32xf32>
    %181 = arith.divf %179, %180 : vector<2x32xf32>
    %182 = arith.mulf %173, %154 : vector<2x32xf32>
    %183 = arith.mulf %167, %175 : vector<2x32xf32>
    %184 = arith.addf %182, %183 : vector<2x32xf32>
    %185 = math.tanh %184 : vector<2x32xf32>
    %186 = arith.mulf %181, %185 : vector<2x32xf32>
    %187 = vector.extract_strided_slice %186 {offsets = [1, 0], sizes = [1, 32], strides = [1, 1]} : vector<2x32xf32> to vector<1x32xf32>
    %c5 = arith.constant 5 : index
    %c0_39 = arith.constant 0 : index
    %188 = vector.load %arg7[%c5, %c0_39] : memref<8x32xf32, #tpu.memory_space<vmem>>, vector<1x32xf32>
    tpu.vector_store %arg7[%c5, %c0_39], %187 {strides = array<i32>} : memref<8x32xf32, #tpu.memory_space<vmem>>, vector<1x32xf32>,
    %189 = vector.extract_strided_slice %5 {offsets = [12, 0], sizes = [2, 128], strides = [1, 1]} : vector<16x128xf32> to vector<2x128xf32>
    %cst_40 = arith.constant dense<0.000000e+00> : vector<2x128xf32>
    %190 = tpu.matmul %186, %6, %cst_40 {dimension_numbers = #tpu.dot_dimension_numbers<[1], [0], [0], [1], [0, 0, 1, 1], [], []>} : vector<2x32xf32>, vector<32x128xf32>, vector<2x128xf32> -> vector<2x128xf32>
    %191 = arith.addf %189, %190 : vector<2x128xf32>
    %192 = vector.extract_strided_slice %191 {offsets = [0, 0], sizes = [2, 32], strides = [1, 1]} : vector<2x128xf32> to vector<2x32xf32>
    %193 = arith.negf %192 : vector<2x32xf32>
    %194 = math.exp %193 : vector<2x32xf32>
    %cst_41 = arith.constant 1.000000e+00 : f32
    %195 = vector.broadcast %cst_41 : f32 to vector<2x32xf32>
    %196 = arith.addf %195, %194 : vector<2x32xf32>
    %197 = arith.divf %195, %196 : vector<2x32xf32>
    %198 = vector.extract_strided_slice %191 {offsets = [0, 32], sizes = [2, 32], strides = [1, 1]} : vector<2x128xf32> to vector<2x32xf32>
    %199 = arith.negf %198 : vector<2x32xf32>
    %200 = math.exp %199 : vector<2x32xf32>
    %cst_42 = arith.constant 1.000000e+00 : f32
    %201 = vector.broadcast %cst_42 : f32 to vector<2x32xf32>
    %202 = arith.addf %201, %200 : vector<2x32xf32>
    %203 = arith.divf %201, %202 : vector<2x32xf32>
    %204 = vector.extract_strided_slice %191 {offsets = [0, 64], sizes = [2, 32], strides = [1, 1]} : vector<2x128xf32> to vector<2x32xf32>
    %205 = math.tanh %204 : vector<2x32xf32>
    %206 = vector.extract_strided_slice %191 {offsets = [0, 96], sizes = [2, 32], strides = [1, 1]} : vector<2x128xf32> to vector<2x32xf32>
    %207 = arith.negf %206 : vector<2x32xf32>
    %208 = math.exp %207 : vector<2x32xf32>
    %cst_43 = arith.constant 1.000000e+00 : f32
    %209 = vector.broadcast %cst_43 : f32 to vector<2x32xf32>
    %210 = arith.addf %209, %208 : vector<2x32xf32>
    %211 = arith.divf %209, %210 : vector<2x32xf32>
    %212 = arith.mulf %203, %184 : vector<2x32xf32>
    %213 = arith.mulf %197, %205 : vector<2x32xf32>
    %214 = arith.addf %212, %213 : vector<2x32xf32>
    %215 = math.tanh %214 : vector<2x32xf32>
    %216 = arith.mulf %211, %215 : vector<2x32xf32>
    %217 = vector.extract_strided_slice %216 {offsets = [1, 0], sizes = [1, 32], strides = [1, 1]} : vector<2x32xf32> to vector<1x32xf32>
    %c6 = arith.constant 6 : index
    %c0_44 = arith.constant 0 : index
    %218 = vector.load %arg7[%c6, %c0_44] : memref<8x32xf32, #tpu.memory_space<vmem>>, vector<1x32xf32>
    tpu.vector_store %arg7[%c6, %c0_44], %217 {strides = array<i32>} : memref<8x32xf32, #tpu.memory_space<vmem>>, vector<1x32xf32>,
    %219 = vector.extract_strided_slice %5 {offsets = [14, 0], sizes = [2, 128], strides = [1, 1]} : vector<16x128xf32> to vector<2x128xf32>
    %cst_45 = arith.constant dense<0.000000e+00> : vector<2x128xf32>
    %220 = tpu.matmul %216, %6, %cst_45 {dimension_numbers = #tpu.dot_dimension_numbers<[1], [0], [0], [1], [0, 0, 1, 1], [], []>} : vector<2x32xf32>, vector<32x128xf32>, vector<2x128xf32> -> vector<2x128xf32>
    %221 = arith.addf %219, %220 : vector<2x128xf32>
    %222 = vector.extract_strided_slice %221 {offsets = [0, 0], sizes = [2, 32], strides = [1, 1]} : vector<2x128xf32> to vector<2x32xf32>
    %223 = arith.negf %222 : vector<2x32xf32>
    %224 = math.exp %223 : vector<2x32xf32>
    %cst_46 = arith.constant 1.000000e+00 : f32
    %225 = vector.broadcast %cst_46 : f32 to vector<2x32xf32>
    %226 = arith.addf %225, %224 : vector<2x32xf32>
    %227 = arith.divf %225, %226 : vector<2x32xf32>
    %228 = vector.extract_strided_slice %221 {offsets = [0, 32], sizes = [2, 32], strides = [1, 1]} : vector<2x128xf32> to vector<2x32xf32>
    %229 = arith.negf %228 : vector<2x32xf32>
    %230 = math.exp %229 : vector<2x32xf32>
    %cst_47 = arith.constant 1.000000e+00 : f32
    %231 = vector.broadcast %cst_47 : f32 to vector<2x32xf32>
    %232 = arith.addf %231, %230 : vector<2x32xf32>
    %233 = arith.divf %231, %232 : vector<2x32xf32>
    %234 = vector.extract_strided_slice %221 {offsets = [0, 64], sizes = [2, 32], strides = [1, 1]} : vector<2x128xf32> to vector<2x32xf32>
    %235 = math.tanh %234 : vector<2x32xf32>
    %236 = vector.extract_strided_slice %221 {offsets = [0, 96], sizes = [2, 32], strides = [1, 1]} : vector<2x128xf32> to vector<2x32xf32>
    %237 = arith.negf %236 : vector<2x32xf32>
    %238 = math.exp %237 : vector<2x32xf32>
    %cst_48 = arith.constant 1.000000e+00 : f32
    %239 = vector.broadcast %cst_48 : f32 to vector<2x32xf32>
    %240 = arith.addf %239, %238 : vector<2x32xf32>
    %241 = arith.divf %239, %240 : vector<2x32xf32>
    %242 = arith.mulf %233, %214 : vector<2x32xf32>
    %243 = arith.mulf %227, %235 : vector<2x32xf32>
    %244 = arith.addf %242, %243 : vector<2x32xf32>
    %245 = math.tanh %244 : vector<2x32xf32>
    %246 = arith.mulf %241, %245 : vector<2x32xf32>
    %247 = vector.extract_strided_slice %246 {offsets = [1, 0], sizes = [1, 32], strides = [1, 1]} : vector<2x32xf32> to vector<1x32xf32>
    %c7 = arith.constant 7 : index
    %c0_49 = arith.constant 0 : index
    %248 = vector.load %arg7[%c7, %c0_49] : memref<8x32xf32, #tpu.memory_space<vmem>>, vector<1x32xf32>
    tpu.vector_store %arg7[%c7, %c0_49], %247 {strides = array<i32>} : memref<8x32xf32, #tpu.memory_space<vmem>>, vector<1x32xf32>,
    %c0_50 = arith.constant 0 : index
    %c0_51 = arith.constant 0 : index
    %249 = vector.load %arg7[%c0_50, %c0_51] : memref<8x32xf32, #tpu.memory_space<vmem>>, vector<8x32xf32>
    %c0_52 = arith.constant 0 : index
    %c0_53 = arith.constant 0 : index
    %250 = vector.load %arg4[%c0_52, %c0_53] : memref<32x8xf32, #tpu.memory_space<vmem>>, vector<32x8xf32>
    %cst_54 = arith.constant dense<0.000000e+00> : vector<8x8xf32>
    %251 = tpu.matmul %249, %250, %cst_54 {dimension_numbers = #tpu.dot_dimension_numbers<[1], [0], [0], [1], [0, 0, 1, 1], [], []>} : vector<8x32xf32>, vector<32x8xf32>, vector<8x8xf32> -> vector<8x8xf32>
    %c0_55 = arith.constant 0 : index
    %c0_56 = arith.constant 0 : index
    %252 = vector.load %arg5[%c0_55, %c0_56] : memref<1x8xf32, #tpu.memory_space<vmem>>, vector<1x8xf32>
    %253 = vector.broadcast %252 : vector<1x8xf32> to vector<8x8xf32>
    %254 = arith.addf %251, %253 : vector<8x8xf32>
    %c0_57 = arith.constant 0 : index
    %c0_58 = arith.constant 0 : index
    %255 = vector.load %arg6[%c0_57, %c0_58] : memref<8x8xf32, #tpu.memory_space<vmem>>, vector<8x8xf32>
    tpu.vector_store %arg6[%c0_57, %c0_58], %254 {strides = array<i32>} : memref<8x8xf32, #tpu.memory_space<vmem>>, vector<8x8xf32>,
    return
  }
}

</mosaic_0001>

<llo_original>
// kernel: lstm_model_forward_pallas.1
$region0: #{lstm_model_forward_pallas.1}
  #allocation0 [shape = 'u32[]', space=smem, size = 0x4, offset = 0x4, fixed_abs, tag = 'smem constant byte address 0x4 - core index']
  #allocation1 [shape = 'u32[72,128]{1,0:T(1,128)}', space=vmem, size = 0x9000, scoped, tag = 'internal scratch']
  #allocation2 [shape = 'f32[8,32]{1,0:T(8,128)}', space=vmem, size = 0x1000, scoped, tag = 'scratch operand']
  %s0 = inlined_call_operand.hbm [shape: f32[16,16], index: 0, kind: input, shape index: {}]
  %s1 = inlined_call_operand.hbm [shape: f32[16,128], index: 1, kind: input, shape index: {}]
  %s2 = inlined_call_operand.vmem [shape: f32[32,128], index: 2, kind: input, shape index: {}]
  %s3 = inlined_call_operand.vmem [shape: f32[1,128], index: 3, kind: input, shape index: {}]
  %s4 = inlined_call_operand.vmem [shape: f32[32,8], index: 4, kind: input, shape index: {}]
  %s5 = inlined_call_operand.vmem [shape: f32[1,8], index: 5, kind: input, shape index: {}]
  %s6 = inlined_call_operand.hbm [shape: f32[8,8], index: 6, kind: output, shape index: {}]
  %s7 = sld [smem:[#allocation0]]
  $region42: #{lstm_model_forward_pallas.1} parent=0
    _
  %s9 = ssub.s32 1, %s7
  %s10 = scalar_select 0, %s9, %s7
  $region1: #{lstm_model_forward_pallas.1} parent=0
    #allocation3 [shape = 'u8[8192]{0}', space=vmem, size = 0x2000, scoped, tag = 'input window, operand 0, single buffered']
    #allocation4 [shape = 's32[1]{0}', space=sflag, size = 0x4, scoped, tag = 'scoped memory for lstm_model_forward_pallas.1']
    #allocation5 [shape = 's32[1]{0}', space=sflag, size = 0x4, scoped, tag = 'scoped memory for lstm_model_forward_pallas.1']
    #allocation6 [shape = 'u8[8192]{0}', space=vmem, size = 0x2000, scoped, tag = 'input window, operand 1, single buffered']
    #allocation7 [shape = 's32[1]{0}', space=sflag, size = 0x4, scoped, tag = 'scoped memory for lstm_model_forward_pallas.1']
    #allocation8 [shape = 'u8[4096]{0}', space=vmem, size = 0x1000, scoped, tag = 'output window, operand 0, single buffered']
    %11 = vsyncpa [#allocation4], 0
    %12 = vsyncpa [#allocation7], 0
    %13 = vsyncpa [#allocation5], 0
    // Predicated region
    $region2: #{lstm_model_forward_pallas.1} parent=1 // pred_check
      _
    $region3: #{lstm_model_forward_pallas.1} parent=1 // pred_check_branch
      %15 = sbr.rel (0) target = $region5
    $region4: #{lstm_model_forward_pallas.1} parent=1 // pred_region
      %17 = vsyncadd [#allocation4], 0
      %s18 = sshll.u32 %s0, 4
      %s19 = int_to_ptr.hbm [resolvable:$true] %s18
      %s20 = sshll.u32 [#allocation3], 4
      %s21 = int_to_ptr.vmem [resolvable:$true] %s20
      %26 = dma.hbm_to_vmem [thread:$0]  %s19, 256, %s21, [#allocation4], 128, 128, 8
    $region5: #{lstm_model_forward_pallas.1} parent=1 // pred_fallthru
      _
    // Predicated region
    $region6: #{lstm_model_forward_pallas.1} parent=1 // pred_check
      _
    $region7: #{lstm_model_forward_pallas.1} parent=1 // pred_check_branch
      %28 = sbr.rel (0) target = $region9
    $region8: #{lstm_model_forward_pallas.1} parent=1 // pred_region
      %30 = vsyncadd [#allocation7], 0
      %s31 = sshll.u32 %s1, 4
      %s32 = int_to_ptr.hbm [resolvable:$true] %s31
      %s33 = sshll.u32 [#allocation6], 4
      %s34 = int_to_ptr.vmem [resolvable:$true] %s33
      %39 = dma.hbm_to_vmem [thread:$0]  %s32, 256, %s34, [#allocation7], 128, 128, 8
    $region9: #{lstm_model_forward_pallas.1} parent=1 // pred_fallthru
      _
    // Predicated region
    $region10: #{lstm_model_forward_pallas.1} parent=1 // pred_check
      _
    $region11: #{lstm_model_forward_pallas.1} parent=1 // pred_check_branch
      %41 = sbr.rel (0) target = $region13
    $region12: #{lstm_model_forward_pallas.1} parent=1 // pred_region
      _
    $region13: #{lstm_model_forward_pallas.1} parent=1 // pred_fallthru
      _
    // Predicated region
    $region14: #{lstm_model_forward_pallas.1} parent=1 // pred_check
      _
    $region15: #{lstm_model_forward_pallas.1} parent=1 // pred_check_branch
      %43 = sbr.rel (0) target = $region17
    $region16: #{lstm_model_forward_pallas.1} parent=1 // pred_region
      _
    $region17: #{lstm_model_forward_pallas.1} parent=1 // pred_fallthru
      _
    // Predicated region
    $region18: #{lstm_model_forward_pallas.1} parent=1 // pred_check
      _
    $region19: #{lstm_model_forward_pallas.1} parent=1 // pred_check_branch
      %45 = sbr.rel (0) target = $region21
    $region20: #{lstm_model_forward_pallas.1} parent=1 // pred_region
      _
    $region21: #{lstm_model_forward_pallas.1} parent=1 // pred_fallthru
      _
    // Predicated region
    $region22: #{lstm_model_forward_pallas.1} parent=1 // pred_check
      _
    $region23: #{lstm_model_forward_pallas.1} parent=1 // pred_check_branch
      %47 = sbr.rel (0) target = $region25
    $region24: #{lstm_model_forward_pallas.1} parent=1 // pred_region
      _
    $region25: #{lstm_model_forward_pallas.1} parent=1 // pred_fallthru
      _
    // Predicated region
    $region26: #{lstm_model_forward_pallas.1} parent=1 // pred_check
      _
    $region27: #{lstm_model_forward_pallas.1} parent=1 // pred_check_branch
      %49 = sbr.rel (0) target = $region29
    $region28: #{lstm_model_forward_pallas.1} parent=1 // pred_region
      %51 = dma.done [#allocation4], 256
    $region29: #{lstm_model_forward_pallas.1} parent=1 // pred_fallthru
      _
    // Predicated region
    $region30: #{lstm_model_forward_pallas.1} parent=1 // pred_check
      _
    $region31: #{lstm_model_forward_pallas.1} parent=1 // pred_check_branch
      %53 = sbr.rel (0) target = $region33
    $region32: #{lstm_model_forward_pallas.1} parent=1 // pred_region
      %55 = dma.done [#allocation7], 256
    $region33: #{lstm_model_forward_pallas.1} parent=1 // pred_fallthru
      _
    %v56 = vld [vmem:[#allocation3] sm:$0xff]
    %v57 = vld [vmem:[#allocation3 + $0x8] sm:$0xff]
    %v58 = vld [vmem:[#allocation6] sm:$0xff]
    %v59 = vld [vmem:[#allocation6 + $0x8] sm:$0xff]
    %v60 = vld [vmem:[%s3] sm:$0x1]
    %v62 = vperm.slane %v60, 0
    %vm64 = vcmask 130048
    %v66 = vsel %vm64, %v56, 0
    %v69 = vsel %vm64, %v57, 0
    %71 = vmatpush.msra.mxu0 0.0
    %72 = vmatpush.msra.mxu0 0.0
    %73 = vmatpush.msra.mxu0 0.0
    %74 = vmatpush.msra.mxu0 0.0
    %75 = vmatpush.msra.mxu0 0.0
    %76 = vmatpush.msra.mxu0 0.0
    %77 = vmatpush.msra.mxu0 0.0
    %78 = vmatpush.msra.mxu0 0.0
    %79 = vmatpush.msra.mxu0 0.0
    %80 = vmatpush.msra.mxu0 0.0
    %81 = vmatpush.msra.mxu0 0.0
    %82 = vmatpush.msra.mxu0 0.0
    %83 = vmatpush.msra.mxu0 0.0
    %84 = vmatpush.msra.mxu0 0.0
    %85 = vmatpush.msra.mxu0 %v59
    %86 = vmatpush.msra.mxu0 %v58
    %87 = vmatmul.f32.gmra.mxu0 %v66
    %v88 = vpop.f32.mrf.mxu0
    %v89 = vadd.f32 %v62, %v88
    %90 = vmatmul.f32.gmra.mxu0 %v69
    %v91 = vpop.f32.mrf.mxu0
    %v92 = vadd.f32 %v62, %v91
    %93 = vdwg.mxu0
    %v94 = vld [vmem:[%s2] sm:$0xff]
    %v95 = vld [vmem:[%s2 + $0x8] sm:$0xff]
    %v96 = vld [vmem:[%s2 + $0x10] sm:$0xff]
    %v97 = vld [vmem:[%s2 + $0x18] sm:$0xff]
    %vm98 = vcmask 261120
    %v100 = vsel %vm98, 0.0, 0
    %102 = vmatpush.msra.mxu0 0.0
    %103 = vmatpush.msra.mxu0 0.0
    %104 = vmatpush.msra.mxu0 0.0
    %105 = vmatpush.msra.mxu0 0.0
    %106 = vmatpush.msra.mxu0 0.0
    %107 = vmatpush.msra.mxu0 0.0
    %108 = vmatpush.msra.mxu0 0.0
    %109 = vmatpush.msra.mxu0 0.0
    %110 = vmatpush.msra.mxu0 0.0
    %111 = vmatpush.msra.mxu0 0.0
    %112 = vmatpush.msra.mxu0 0.0
    %113 = vmatpush.msra.mxu0 0.0
    %114 = vmatpush.msra.mxu0 %v97
    %115 = vmatpush.msra.mxu0 %v96
    %116 = vmatpush.msra.mxu0 %v95
    %117 = vmatpush.msra.mxu0 %v94
    %118 = vmatmul.f32.gmra.mxu0 %v100
    %v119 = vpop.f32.mrf.mxu0
    %v120 = vadd.f32 0.0, %v119
    %121 = vdwg.mxu0
    %v122 = vadd.f32 %v89, %v120
    %v123 = vxor.u32 %v122, 2147483648
    %v124 = vmul.f32 %v123, 1.442695
    %v125 = vpow.pop %v124
    %v126 = vadd.f32 %v125, 1.0
    %v127 = vrcp.pop %v126
    %v128 = vmul.f32 %v126, %v127
    %v129 = vsub.f32 1.0, %v128
    %v130 = vmul.f32 %v127, %v129
    %v131 = vadd.f32 %v127, %v130
    %vm132 = vweird.f32 %v126
    %vm133 = vweird.f32 %v127
    %vm134 = vmor %vm132, %vm133
    %v135 = vsel %vm134, %v127, %v131
    %v136 = vand.u32 2147483647, %v126
    %vm137 = vcmp.eq.f32.partialorder %v136, 8.507059e+37
    %v138 = vand.u32 %v126, 2147483648
    %v139 = vor.u32 1.1754944e-38, %v138
    %v140 = vsel %vm137, %v139, %v135
    %v141 = vmul.f32 1.0, %v140
    %v142 = vtanh.pop %v122
    %v143 = vmul.f32 %v141, 0.0
    %145 = vrot.lane.b32.xlu0 %v142, 64
    %v146 = vpop.permute.xlu0 %145
    %v148 = vmul.f32 %v141, %v146
    %150 = vrot.lane.b32.xlu0 %v148, 32
    %v151 = vpop.permute.xlu0 %150
    %v153 = vadd.f32 %v143, %v151
    %v154 = vtanh.pop %v153
    %156 = vrot.lane.b32.xlu0 %v154, 64
    %v157 = vpop.permute.xlu0 %156
    %v159 = vmul.f32 %v141, %v157
    %161 = vrot.lane.b32.xlu0 %v159, 32
    %v162 = vpop.permute.xlu0 %161
    %vm164 = vcmask 254977
    %165 = vst.msk [vmem:[#allocation2 - $0x1] sm:$0x2] %vm164, %v162
    %v166 = vsel %vm98, %v162, 0
    %168 = vmatpush.msra.mxu0 0.0
    %169 = vmatpush.msra.mxu0 0.0
    %170 = vmatpush.msra.mxu0 0.0
    %171 = vmatpush.msra.mxu0 0.0
    %172 = vmatpush.msra.mxu0 0.0
    %173 = vmatpush.msra.mxu0 0.0
    %174 = vmatpush.msra.mxu0 0.0
    %175 = vmatpush.msra.mxu0 0.0
    %176 = vmatpush.msra.mxu0 0.0
    %177 = vmatpush.msra.mxu0 0.0
    %178 = vmatpush.msra.mxu0 0.0
    %179 = vmatpush.msra.mxu0 0.0
    %180 = vmatpush.msra.mxu0 %v97
    %181 = vmatpush.msra.mxu0 %v96
    %182 = vmatpush.msra.mxu0 %v95
    %183 = vmatpush.msra.mxu0 %v94
    %184 = vmatmul.f32.gmra.mxu0 %v166
    %v185 = vpop.f32.mrf.mxu0
    %v186 = vadd.f32 0.0, %v185
    %187 = vdwg.mxu0
    %v189 = vrot.slane %v186, 6
    %v191 = vadd.f32 %v89, %v189
    %v192 = vxor.u32 %v191, 2147483648
    %v193 = vmul.f32 %v192, 1.442695
    %v194 = vpow.pop %v193
    %v195 = vadd.f32 %v194, 1.0
    %v196 = vrcp.pop %v195
    %v197 = vmul.f32 %v195, %v196
    %v198 = vsub.f32 1.0, %v197
    %v199 = vmul.f32 %v196, %v198
    %v200 = vadd.f32 %v196, %v199
    %vm201 = vweird.f32 %v195
    %vm202 = vweird.f32 %v196
    %vm203 = vmor %vm201, %vm202
    %v204 = vsel %vm203, %v196, %v200
    %v205 = vand.u32 2147483647, %v195
    %vm206 = vcmp.eq.f32.partialorder %v205, 8.507059e+37
    %v207 = vand.u32 %v195, 2147483648
    %v208 = vor.u32 1.1754944e-38, %v207
    %v209 = vsel %vm206, %v208, %v204
    %v210 = vmul.f32 1.0, %v209
    %v211 = vtanh.pop %v191
    %v213 = vrot.slane %v153, 6
    %v215 = vmul.f32 %v210, %v213
    %217 = vrot.lane.b32.xlu0 %v211, 64
    %v218 = vpop.permute.xlu0 %217
    %v220 = vmul.f32 %v210, %v218
    %222 = vrot.lane.b32.xlu0 %v220, 32
    %v223 = vpop.permute.xlu0 %222
    %v225 = vadd.f32 %v215, %v223
    %v226 = vtanh.pop %v225
    %228 = vrot.lane.b32.xlu0 %v226, 64
    %v229 = vpop.permute.xlu0 %228
    %v231 = vmul.f32 %v210, %v229
    %233 = vrot.lane.b32.xlu0 %v231, 32
    %v234 = vpop.permute.xlu0 %233
    %vm236 = vcmask 257027
    %237 = vst.msk [vmem:[#allocation2 - $0x2] sm:$0x8] %vm236, %v234
    %v238 = vrot.slane %v231, 2
    %239 = vrot.lane.b32.xlu0 %v238, 32
    %v240 = vpop.permute.xlu0 %239
    %v241 = vsel %vm98, %v240, 0
    %243 = vmatpush.msra.mxu0 0.0
    %244 = vmatpush.msra.mxu0 0.0
    %245 = vmatpush.msra.mxu0 0.0
    %246 = vmatpush.msra.mxu0 0.0
    %247 = vmatpush.msra.mxu0 0.0
    %248 = vmatpush.msra.mxu0 0.0
    %249 = vmatpush.msra.mxu0 0.0
    %250 = vmatpush.msra.mxu0 0.0
    %251 = vmatpush.msra.mxu0 0.0
    %252 = vmatpush.msra.mxu0 0.0
    %253 = vmatpush.msra.mxu0 0.0
    %254 = vmatpush.msra.mxu0 0.0
    %255 = vmatpush.msra.mxu0 %v97
    %256 = vmatpush.msra.mxu0 %v96
    %257 = vmatpush.msra.mxu0 %v95
    %258 = vmatpush.msra.mxu0 %v94
    %259 = vmatmul.f32.gmra.mxu0 %v241
    %v260 = vpop.f32.mrf.mxu0
    %v261 = vadd.f32 0.0, %v260
    %262 = vdwg.mxu0
    %v264 = vrot.slane %v261, 4
    %v266 = vadd.f32 %v89, %v264
    %v267 = vxor.u32 %v266, 2147483648
    %v268 = vmul.f32 %v267, 1.442695
    %v269 = vpow.pop %v268
    %v270 = vadd.f32 %v269, 1.0
    %v271 = vrcp.pop %v270
    %v272 = vmul.f32 %v270, %v271
    %v273 = vsub.f32 1.0, %v272
    %v274 = vmul.f32 %v271, %v273
    %v275 = vadd.f32 %v271, %v274
    %vm276 = vweird.f32 %v270
    %vm277 = vweird.f32 %v271
    %vm278 = vmor %vm276, %vm277
    %v279 = vsel %vm278, %v271, %v275
    %v280 = vand.u32 2147483647, %v270
    %vm281 = vcmp.eq.f32.partialorder %v280, 8.507059e+37
    %v282 = vand.u32 %v270, 2147483648
    %v283 = vor.u32 1.1754944e-38, %v282
    %v284 = vsel %vm281, %v283, %v279
    %v285 = vmul.f32 1.0, %v284
    %v286 = vtanh.pop %v266
    %v288 = vrot.slane %v225, 6
    %v290 = vmul.f32 %v285, %v288
    %292 = vrot.lane.b32.xlu0 %v286, 64
    %v293 = vpop.permute.xlu0 %292
    %v295 = vmul.f32 %v285, %v293
    %297 = vrot.lane.b32.xlu0 %v295, 32
    %v298 = vpop.permute.xlu0 %297
    %v300 = vadd.f32 %v290, %v298
    %v301 = vtanh.pop %v300
    %303 = vrot.lane.b32.xlu0 %v301, 64
    %v304 = vpop.permute.xlu0 %303
    %v306 = vmul.f32 %v285, %v304
    %308 = vrot.lane.b32.xlu0 %v306, 32
    %v309 = vpop.permute.xlu0 %308
    %vm311 = vcmask 259077
    %312 = vst.msk [vmem:[#allocation2 - $0x3] sm:$0x20] %vm311, %v309
    %v313 = vrot.slane %v306, 4
    %314 = vrot.lane.b32.xlu0 %v313, 32
    %v315 = vpop.permute.xlu0 %314
    %v316 = vsel %vm98, %v315, 0
    %318 = vmatpush.msra.mxu0 0.0
    %319 = vmatpush.msra.mxu0 0.0
    %320 = vmatpush.msra.mxu0 0.0
    %321 = vmatpush.msra.mxu0 0.0
    %322 = vmatpush.msra.mxu0 0.0
    %323 = vmatpush.msra.mxu0 0.0
    %324 = vmatpush.msra.mxu0 0.0
    %325 = vmatpush.msra.mxu0 0.0
    %326 = vmatpush.msra.mxu0 0.0
    %327 = vmatpush.msra.mxu0 0.0
    %328 = vmatpush.msra.mxu0 0.0
    %329 = vmatpush.msra.mxu0 0.0
    %330 = vmatpush.msra.mxu0 %v97
    %331 = vmatpush.msra.mxu0 %v96
    %332 = vmatpush.msra.mxu0 %v95
    %333 = vmatpush.msra.mxu0 %v94
    %334 = vmatmul.f32.gmra.mxu0 %v316
    %v335 = vpop.f32.mrf.mxu0
    %v336 = vadd.f32 0.0, %v335
    %337 = vdwg.mxu0
    %v339 = vrot.slane %v336, 2
    %v341 = vadd.f32 %v89, %v339
    %v342 = vxor.u32 %v341, 2147483648
    %v343 = vmul.f32 %v342, 1.442695
    %v344 = vpow.pop %v343
    %v345 = vadd.f32 %v344, 1.0
    %v346 = vrcp.pop %v345
    %v347 = vmul.f32 %v345, %v346
    %v348 = vsub.f32 1.0, %v347
    %v349 = vmul.f32 %v346, %v348
    %v350 = vadd.f32 %v346, %v349
    %vm351 = vweird.f32 %v345
    %vm352 = vweird.f32 %v346
    %vm353 = vmor %vm351, %vm352
    %v354 = vsel %vm353, %v346, %v350
    %v355 = vand.u32 2147483647, %v345
    %vm356 = vcmp.eq.f32.partialorder %v355, 8.507059e+37
    %v357 = vand.u32 %v345, 2147483648
    %v358 = vor.u32 1.1754944e-38, %v357
    %v359 = vsel %vm356, %v358, %v354
    %v360 = vmul.f32 1.0, %v359
    %v361 = vtanh.pop %v341
    %v363 = vrot.slane %v300, 6
    %v365 = vmul.f32 %v360, %v363
    %367 = vrot.lane.b32.xlu0 %v361, 64
    %v368 = vpop.permute.xlu0 %367
    %v370 = vmul.f32 %v360, %v368
    %372 = vrot.lane.b32.xlu0 %v370, 32
    %v373 = vpop.permute.xlu0 %372
    %v375 = vadd.f32 %v365, %v373
    %v376 = vtanh.pop %v375
    %378 = vrot.lane.b32.xlu0 %v376, 64
    %v379 = vpop.permute.xlu0 %378
    %v381 = vmul.f32 %v360, %v379
    %383 = vrot.lane.b32.xlu0 %v381, 32
    %v384 = vpop.permute.xlu0 %383
    %vm386 = vcmask 261127
    %387 = vst.msk [vmem:[#allocation2 - $0x4] sm:$0x80] %vm386, %v384
    %v388 = vrot.slane %v381, 6
    %389 = vrot.lane.b32.xlu0 %v388, 32
    %v390 = vpop.permute.xlu0 %389
    %v391 = vsel %vm98, %v390, 0
    %393 = vmatpush.msra.mxu0 0.0
    %394 = vmatpush.msra.mxu0 0.0
    %395 = vmatpush.msra.mxu0 0.0
    %396 = vmatpush.msra.mxu0 0.0
    %397 = vmatpush.msra.mxu0 0.0
    %398 = vmatpush.msra.mxu0 0.0
    %399 = vmatpush.msra.mxu0 0.0
    %400 = vmatpush.msra.mxu0 0.0
    %401 = vmatpush.msra.mxu0 0.0
    %402 = vmatpush.msra.mxu0 0.0
    %403 = vmatpush.msra.mxu0 0.0
    %404 = vmatpush.msra.mxu0 0.0
    %405 = vmatpush.msra.mxu0 %v97
    %406 = vmatpush.msra.mxu0 %v96
    %407 = vmatpush.msra.mxu0 %v95
    %408 = vmatpush.msra.mxu0 %v94
    %409 = vmatmul.f32.gmra.mxu0 %v391
    %v410 = vpop.f32.mrf.mxu0
    %v411 = vadd.f32 0.0, %v410
    %412 = vdwg.mxu0
    %v413 = vadd.f32 %v92, %v411
    %v414 = vxor.u32 %v413, 2147483648
    %v415 = vmul.f32 %v414, 1.442695
    %v416 = vpow.pop %v415
    %v417 = vadd.f32 %v416, 1.0
    %v418 = vrcp.pop %v417
    %v419 = vmul.f32 %v417, %v418
    %v420 = vsub.f32 1.0, %v419
    %v421 = vmul.f32 %v418, %v420
    %v422 = vadd.f32 %v418, %v421
    %vm423 = vweird.f32 %v417
    %vm424 = vweird.f32 %v418
    %vm425 = vmor %vm423, %vm424
    %v426 = vsel %vm425, %v418, %v422
    %v427 = vand.u32 2147483647, %v417
    %vm428 = vcmp.eq.f32.partialorder %v427, 8.507059e+37
    %v429 = vand.u32 %v417, 2147483648
    %v430 = vor.u32 1.1754944e-38, %v429
    %v431 = vsel %vm428, %v430, %v426
    %v432 = vmul.f32 1.0, %v431
    %v433 = vtanh.pop %v413
    %v435 = vrot.slane %v375, 6
    %v437 = vmul.f32 %v432, %v435
    %439 = vrot.lane.b32.xlu0 %v433, 64
    %v440 = vpop.permute.xlu0 %439
    %v442 = vmul.f32 %v432, %v440
    %444 = vrot.lane.b32.xlu0 %v442, 32
    %v445 = vpop.permute.xlu0 %444
    %v447 = vadd.f32 %v437, %v445
    %v448 = vtanh.pop %v447
    %450 = vrot.lane.b32.xlu0 %v448, 64
    %v451 = vpop.permute.xlu0 %450
    %v453 = vmul.f32 %v432, %v451
    %455 = vrot.lane.b32.xlu0 %v453, 32
    %v456 = vpop.permute.xlu0 %455
    %458 = vst.msk [vmem:[#allocation2 + $0x3] sm:$0x2] %vm164, %v456
    %v459 = vsel %vm98, %v456, 0
    %461 = vmatpush.msra.mxu0 0.0
    %462 = vmatpush.msra.mxu0 0.0
    %463 = vmatpush.msra.mxu0 0.0
    %464 = vmatpush.msra.mxu0 0.0
    %465 = vmatpush.msra.mxu0 0.0
    %466 = vmatpush.msra.mxu0 0.0
    %467 = vmatpush.msra.mxu0 0.0
    %468 = vmatpush.msra.mxu0 0.0
    %469 = vmatpush.msra.mxu0 0.0
    %470 = vmatpush.msra.mxu0 0.0
    %471 = vmatpush.msra.mxu0 0.0
    %472 = vmatpush.msra.mxu0 0.0
    %473 = vmatpush.msra.mxu0 %v97
    %474 = vmatpush.msra.mxu0 %v96
    %475 = vmatpush.msra.mxu0 %v95
    %476 = vmatpush.msra.mxu0 %v94
    %477 = vmatmul.f32.gmra.mxu0 %v459
    %v478 = vpop.f32.mrf.mxu0
    %v479 = vadd.f32 0.0, %v478
    %480 = vdwg.mxu0
    %v482 = vrot.slane %v479, 6
    %v484 = vadd.f32 %v92, %v482
    %v485 = vxor.u32 %v484, 2147483648
    %v486 = vmul.f32 %v485, 1.442695
    %v487 = vpow.pop %v486
    %v488 = vadd.f32 %v487, 1.0
    %v489 = vrcp.pop %v488
    %v490 = vmul.f32 %v488, %v489
    %v491 = vsub.f32 1.0, %v490
    %v492 = vmul.f32 %v489, %v491
    %v493 = vadd.f32 %v489, %v492
    %vm494 = vweird.f32 %v488
    %vm495 = vweird.f32 %v489
    %vm496 = vmor %vm494, %vm495
    %v497 = vsel %vm496, %v489, %v493
    %v498 = vand.u32 2147483647, %v488
    %vm499 = vcmp.eq.f32.partialorder %v498, 8.507059e+37
    %v500 = vand.u32 %v488, 2147483648
    %v501 = vor.u32 1.1754944e-38, %v500
    %v502 = vsel %vm499, %v501, %v497
    %v503 = vmul.f32 1.0, %v502
    %v504 = vtanh.pop %v484
    %v506 = vrot.slane %v447, 6
    %v508 = vmul.f32 %v503, %v506
    %510 = vrot.lane.b32.xlu0 %v504, 64
    %v511 = vpop.permute.xlu0 %510
    %v513 = vmul.f32 %v503, %v511
    %515 = vrot.lane.b32.xlu0 %v513, 32
    %v516 = vpop.permute.xlu0 %515
    %v518 = vadd.f32 %v508, %v516
    %v519 = vtanh.pop %v518
    %521 = vrot.lane.b32.xlu0 %v519, 64
    %v522 = vpop.permute.xlu0 %521
    %v524 = vmul.f32 %v503, %v522
    %526 = vrot.lane.b32.xlu0 %v524, 32
    %v527 = vpop.permute.xlu0 %526
    %529 = vst.msk [vmem:[#allocation2 + $0x2] sm:$0x8] %vm236, %v527
    %v530 = vrot.slane %v524, 2
    %531 = vrot.lane.b32.xlu0 %v530, 32
    %v532 = vpop.permute.xlu0 %531
    %v533 = vsel %vm98, %v532, 0
    %535 = vmatpush.msra.mxu0 0.0
    %536 = vmatpush.msra.mxu0 0.0
    %537 = vmatpush.msra.mxu0 0.0
    %538 = vmatpush.msra.mxu0 0.0
    %539 = vmatpush.msra.mxu0 0.0
    %540 = vmatpush.msra.mxu0 0.0
    %541 = vmatpush.msra.mxu0 0.0
    %542 = vmatpush.msra.mxu0 0.0
    %543 = vmatpush.msra.mxu0 0.0
    %544 = vmatpush.msra.mxu0 0.0
    %545 = vmatpush.msra.mxu0 0.0
    %546 = vmatpush.msra.mxu0 0.0
    %547 = vmatpush.msra.mxu0 %v97
    %548 = vmatpush.msra.mxu0 %v96
    %549 = vmatpush.msra.mxu0 %v95
    %550 = vmatpush.msra.mxu0 %v94
    %551 = vmatmul.f32.gmra.mxu0 %v533
    %v552 = vpop.f32.mrf.mxu0
    %v553 = vadd.f32 0.0, %v552
    %554 = vdwg.mxu0
    %v556 = vrot.slane %v553, 4
    %v558 = vadd.f32 %v92, %v556
    %v559 = vxor.u32 %v558, 2147483648
    %v560 = vmul.f32 %v559, 1.442695
    %v561 = vpow.pop %v560
    %v562 = vadd.f32 %v561, 1.0
    %v563 = vrcp.pop %v562
    %v564 = vmul.f32 %v562, %v563
    %v565 = vsub.f32 1.0, %v564
    %v566 = vmul.f32 %v563, %v565
    %v567 = vadd.f32 %v563, %v566
    %vm568 = vweird.f32 %v562
    %vm569 = vweird.f32 %v563
    %vm570 = vmor %vm568, %vm569
    %v571 = vsel %vm570, %v563, %v567
    %v572 = vand.u32 2147483647, %v562
    %vm573 = vcmp.eq.f32.partialorder %v572, 8.507059e+37
    %v574 = vand.u32 %v562, 2147483648
    %v575 = vor.u32 1.1754944e-38, %v574
    %v576 = vsel %vm573, %v575, %v571
    %v577 = vmul.f32 1.0, %v576
    %v578 = vtanh.pop %v558
    %v580 = vrot.slane %v518, 6
    %v582 = vmul.f32 %v577, %v580
    %584 = vrot.lane.b32.xlu0 %v578, 64
    %v585 = vpop.permute.xlu0 %584
    %v587 = vmul.f32 %v577, %v585
    %589 = vrot.lane.b32.xlu0 %v587, 32
    %v590 = vpop.permute.xlu0 %589
    %v592 = vadd.f32 %v582, %v590
    %v593 = vtanh.pop %v592
    %595 = vrot.lane.b32.xlu0 %v593, 64
    %v596 = vpop.permute.xlu0 %595
    %v598 = vmul.f32 %v577, %v596
    %600 = vrot.lane.b32.xlu0 %v598, 32
    %v601 = vpop.permute.xlu0 %600
    %603 = vst.msk [vmem:[#allocation2 + $0x1] sm:$0x20] %vm311, %v601
    %v604 = vrot.slane %v598, 4
    %605 = vrot.lane.b32.xlu0 %v604, 32
    %v606 = vpop.permute.xlu0 %605
    %v607 = vsel %vm98, %v606, 0
    %609 = vmatpush.msra.mxu0 0.0
    %610 = vmatpush.msra.mxu0 0.0
    %611 = vmatpush.msra.mxu0 0.0
    %612 = vmatpush.msra.mxu0 0.0
    %613 = vmatpush.msra.mxu0 0.0
    %614 = vmatpush.msra.mxu0 0.0
    %615 = vmatpush.msra.mxu0 0.0
    %616 = vmatpush.msra.mxu0 0.0
    %617 = vmatpush.msra.mxu0 0.0
    %618 = vmatpush.msra.mxu0 0.0
    %619 = vmatpush.msra.mxu0 0.0
    %620 = vmatpush.msra.mxu0 0.0
    %621 = vmatpush.msra.mxu0 %v97
    %622 = vmatpush.msra.mxu0 %v96
    %623 = vmatpush.msra.mxu0 %v95
    %624 = vmatpush.msra.mxu0 %v94
    %625 = vmatmul.f32.gmra.mxu0 %v607
    %v626 = vpop.f32.mrf.mxu0
    %v627 = vadd.f32 0.0, %v626
    %628 = vdwg.mxu0
    %v630 = vrot.slane %v627, 2
    %v632 = vadd.f32 %v92, %v630
    %v633 = vxor.u32 %v632, 2147483648
    %v634 = vmul.f32 %v633, 1.442695
    %v635 = vpow.pop %v634
    %v636 = vadd.f32 %v635, 1.0
    %v637 = vrcp.pop %v636
    %v638 = vmul.f32 %v636, %v637
    %v639 = vsub.f32 1.0, %v638
    %v640 = vmul.f32 %v637, %v639
    %v641 = vadd.f32 %v637, %v640
    %vm642 = vweird.f32 %v636
    %vm643 = vweird.f32 %v637
    %vm644 = vmor %vm642, %vm643
    %v645 = vsel %vm644, %v637, %v641
    %v646 = vand.u32 2147483647, %v636
    %vm647 = vcmp.eq.f32.partialorder %v646, 8.507059e+37
    %v648 = vand.u32 %v636, 2147483648
    %v649 = vor.u32 1.1754944e-38, %v648
    %v650 = vsel %vm647, %v649, %v645
    %v651 = vmul.f32 1.0, %v650
    %v652 = vtanh.pop %v632
    %v654 = vrot.slane %v592, 6
    %v656 = vmul.f32 %v651, %v654
    %658 = vrot.lane.b32.xlu0 %v652, 64
    %v659 = vpop.permute.xlu0 %658
    %v661 = vmul.f32 %v651, %v659
    %663 = vrot.lane.b32.xlu0 %v661, 32
    %v664 = vpop.permute.xlu0 %663
    %v666 = vadd.f32 %v656, %v664
    %v667 = vtanh.pop %v666
    %669 = vrot.lane.b32.xlu0 %v667, 64
    %v670 = vpop.permute.xlu0 %669
    %v672 = vmul.f32 %v651, %v670
    %674 = vrot.lane.b32.xlu0 %v672, 32
    %v675 = vpop.permute.xlu0 %674
    %677 = vst.msk [vmem:[#allocation2] sm:$0x80] %vm386, %v675
    %v678 = vld [vmem:[#allocation2] sm:$0xff]
    %v679 = vld [vmem:[%s4] sm:$0xff]
    %v680 = vld [vmem:[%s4 + $0x8] sm:$0xff]
    %v681 = vld [vmem:[%s4 + $0x10] sm:$0xff]
    %v682 = vld [vmem:[%s4 + $0x18] sm:$0xff]
    %v683 = vld [vmem:[%s5] sm:$0x1]
    %v685 = vperm.slane %v683, 0
    %v688 = vsel %vm98, %v678, 0
    %690 = vmatpush.msra.mxu0 0.0
    %691 = vmatpush.msra.mxu0 0.0
    %692 = vmatpush.msra.mxu0 0.0
    %693 = vmatpush.msra.mxu0 0.0
    %694 = vmatpush.msra.mxu0 0.0
    %695 = vmatpush.msra.mxu0 0.0
    %696 = vmatpush.msra.mxu0 0.0
    %697 = vmatpush.msra.mxu0 0.0
    %698 = vmatpush.msra.mxu0 0.0
    %699 = vmatpush.msra.mxu0 0.0
    %700 = vmatpush.msra.mxu0 0.0
    %701 = vmatpush.msra.mxu0 0.0
    %702 = vmatpush.msra.mxu0 %v682
    %703 = vmatpush.msra.mxu0 %v681
    %704 = vmatpush.msra.mxu0 %v680
    %705 = vmatpush.msra.mxu0 %v679
    %706 = vmatmul.f32.gmra.mxu0 %v688
    %v707 = vpop.f32.mrf.mxu0
    %v708 = vadd.f32 %v685, %v707
    %709 = vdwg.mxu0
    %vm710 = vcmask 64512
    %711 = vst.msk [vmem:[#allocation8] sm:$0xff] %vm710, %v708
    // Predicated region
    $region34: #{lstm_model_forward_pallas.1} parent=1 // pred_check
      _
    $region35: #{lstm_model_forward_pallas.1} parent=1 // pred_check_branch
      %713 = sbr.rel (0) target = $region37
    $region36: #{lstm_model_forward_pallas.1} parent=1 // pred_region
      %715 = vsyncadd [#allocation5], 0
      %s717 = sshll.u32 [#allocation8], 4
      %s718 = int_to_ptr.vmem [resolvable:$true] %s717
      %s719 = sshll.u32 %s6, 4
      %s720 = int_to_ptr.hbm [resolvable:$true] %s719
      %722 = dma.vmem_to_hbm [thread:$0]  %s718, 128, %s720, [#allocation5]
    $region37: #{lstm_model_forward_pallas.1} parent=1 // pred_fallthru
      _
    // Predicated region
    $region38: #{lstm_model_forward_pallas.1} parent=1 // pred_check
      _
    $region39: #{lstm_model_forward_pallas.1} parent=1 // pred_check_branch
      %724 = sbr.rel (0) target = $region41
    $region40: #{lstm_model_forward_pallas.1} parent=1 // pred_region
      %726 = dma.done [#allocation5], 128
    $region41: #{lstm_model_forward_pallas.1} parent=1 // pred_fallthru
      _
    %727 = vsyncpa [#allocation4], 1
    %728 = vsyncpa [#allocation7], 1
    %729 = vsyncpa [#allocation5], 1

</llo_original>
